<compile_context>
chip_gen: v7x
topology: tpu7x:2x2x1
jax: 0.10.0
libtpu: 0.0.40
codegen_flags: <defaults>
</compile_context>

<pallas_src>
import jax
import jax.numpy as jnp
from jax.experimental import pallas as pl
from jax.experimental.pallas import tpu as pltpu


O_LOGICAL = 2     # true output width of fc_3
O_PAD = 128       # lane-dense padded output width


def mlp_kernel(x_ref, w1_ref, b1_ref, w2_ref, b2_ref, w3_ref, b3_ref, o_ref):
    # fc_1 + ReLU
    h1 = jnp.dot(x_ref[...], w1_ref[...], preferred_element_type=jnp.float32)
    h1 = jnp.maximum(h1 + b1_ref[...], 0.0)
    # fc_2 + ReLU
    h2 = jnp.dot(h1, w2_ref[...], preferred_element_type=jnp.float32)
    h2 = jnp.maximum(h2 + b2_ref[...], 0.0)
    # fc_3 (no activation), written lane-dense (padded to O_PAD columns)
    out = jnp.dot(h2, w3_ref[...], preferred_element_type=jnp.float32)
    o_ref[...] = (out + b3_ref[...]).astype(o_ref.dtype)


def _round_up(v, m):
    return ((v + m - 1) // m) * m


def agent_explore_exploit_forward(x, params):
    """x: (B, state_size) float32; params: (w1, b1, w2, b2, w3, b3) with w3: (H, 2)."""
    w1, b1, w2, b2, w3, b3 = params
    B, S = x.shape
    H = w1.shape[1]

    # ---- choose batch tile -------------------------------------------------
    # Small batch: a single grid step (avoid ~0.35us/step fixed overhead).
    # Large batch: 512-row tiles (multiple of 128 and 256 -> fills MXU M dim on all gens,
    # amortizes per-step cost; per-tile VMEM is negligible).
    if B <= 1024:
        bm = max(8, _round_up(B, 8))      # sublane-aligned, single step
    else:
        bm = 512
    B_pad = _round_up(B, bm)
    grid_steps = B_pad // bm

    # ---- wrapper-side padding (rows of x; columns of the last layer) -------
    x_p = x.astype(jnp.float32)
    if B_pad != B:
        x_p = jnp.pad(x_p, ((0, B_pad - B), (0, 0)))

    # Lane-dense last layer: zero-pad to O_PAD output columns. Padded columns produce
    # exactly 0 (zero weight column + zero bias) and are sliced away below.
    w3_p = jnp.zeros((H, O_PAD), jnp.float32).at[:, :O_LOGICAL].set(w3.astype(jnp.float32))
    b3_p = jnp.zeros((1, O_PAD), jnp.float32).at[:, :O_LOGICAL].set(b3.astype(jnp.float32))

    # ---- specs ---------------------------------------------------------------
    in_specs = [
        pl.BlockSpec((bm, S), lambda i: (i, 0)),        # x           (tiled over batch)
        pl.BlockSpec((S, H), lambda i: (0, 0)),          # w1          (resident)
        pl.BlockSpec((1, H), lambda i: (0, 0)),          # b1
        pl.BlockSpec((H, H), lambda i: (0, 0)),          # w2
        pl.BlockSpec((1, H), lambda i: (0, 0)),          # b2
        pl.BlockSpec((H, O_PAD), lambda i: (0, 0)),      # w3 (padded)
        pl.BlockSpec((1, O_PAD), lambda i: (0, 0)),      # b3 (padded)
    ]
    out_spec = pl.BlockSpec((bm, O_PAD), lambda i: (i, 0))   # lane-dense output tile

    # Only shard the batch axis across TensorCores when there is enough work per core.
    semantics = ("parallel",) if grid_steps >= 4 else ("arbitrary",)

    out_padded = pl.pallas_call(
        mlp_kernel,
        out_shape=jax.ShapeDtypeStruct((B_pad, O_PAD), jnp.float32),
        grid_spec=pl.GridSpec(
            grid=(grid_steps,),
            in_specs=in_specs,
            out_specs=out_spec,
        ),
        compiler_params=pltpu.CompilerParams(
            dimension_semantics=semantics,
        ),
    )(x_p, w1.astype(jnp.float32), b1.astype(jnp.float32),
      w2.astype(jnp.float32), b2.astype(jnp.float32), w3_p, b3_p)

    # Strip row padding and the padded output lanes.
    return out_padded[:B, :O_LOGICAL]


def init_params(key, state_size, hidden_size):
    """Deterministic init mimicking nn.Linear's uniform(-1/sqrt(fan_in), 1/sqrt(fan_in))."""
    ks = jax.random.split(key, 6)

    def lin(kw, kb, fan_in, fan_out):
        bound = 1.0 / jnp.sqrt(fan_in)
        w = jax.random.uniform(kw, (fan_in, fan_out), jnp.float32, -bound, bound)
        b = jax.random.uniform(kb, (1, fan_out), jnp.float32, -bound, bound)
        return w, b

    w1, b1 = lin(ks[0], ks[1], state_size, hidden_size)
    w2, b2 = lin(ks[2], ks[3], hidden_size, hidden_size)
    w3, b3 = lin(ks[4], ks[5], hidden_size, O_LOGICAL)
    return (w1, b1, w2, b2, w3, b3)


def reference_forward(x, params):
    w1, b1, w2, b2, w3, b3 = params
    h1 = jnp.maximum(x @ w1 + b1, 0.0)
    h2 = jnp.maximum(h1 @ w2 + b2, 0.0)
    return h2 @ w3 + b3


if __name__ == "__main__":
    state_size = 16
    hidden_size = 32

    key = jax.random.PRNGKey(0)
    k_x, k_x2, k_p = jax.random.split(key, 3)
    params = init_params(k_p, state_size, hidden_size)

    # Case 1: small batch -> single grid step.
    batch = 16
    x = jax.random.normal(k_x, (batch, state_size), jnp.float32)
    out = jax.block_until_ready(agent_explore_exploit_forward(x, params))
    ref = reference_forward(x, params)
    assert out.shape == (batch, O_LOGICAL), out.shape
    assert jnp.allclose(out, ref, atol=1e-5, rtol=1e-5), "mismatch vs reference (B=16)"

    # Case 2: batch not a multiple of 8 -> exercises the row-padding path.
    batch2 = 13
    x2 = jax.random.normal(k_x2, (batch2, state_size), jnp.float32)
    out2 = jax.block_until_ready(agent_explore_exploit_forward(x2, params))
    ref2 = reference_forward(x2, params)
    assert out2.shape == (batch2, O_LOGICAL), out2.shape
    assert jnp.allclose(out2, ref2, atol=1e-5, rtol=1e-5), "mismatch vs reference (B=13)"

    print("KERNEL_OK")
</pallas_src>

<mosaic_0001>
module attributes {stable_mosaic.version = 11 : i64} {
  func.func @mlp_kernel(%arg0: i32, %arg1: memref<16x16xf32, #tpu.memory_space<vmem>>, %arg2: memref<16x32xf32, #tpu.memory_space<vmem>>, %arg3: memref<1x32xf32, #tpu.memory_space<vmem>>, %arg4: memref<32x32xf32, #tpu.memory_space<vmem>>, %arg5: memref<1x32xf32, #tpu.memory_space<vmem>>, %arg6: memref<32x128xf32, #tpu.memory_space<vmem>>, %arg7: memref<1x128xf32, #tpu.memory_space<vmem>>, %arg8: memref<16x128xf32, #tpu.memory_space<vmem>>) attributes {dimension_semantics = [#tpu.dimension_semantics<arbitrary>], iteration_bounds = array<i64: 1>, scalar_prefetch = 0 : i64, scratch_operands = 0 : i64, tpu.core_type = #tpu.core_type<tc>, window_params = [{transform_indices = @transform_0, window_bounds = array<i64: 16, 16>}, {pipeline_mode = #tpu.pipeline_mode<synchronous>, transform_indices = @transform_1, window_bounds = array<i64: 16, 32>}, {pipeline_mode = #tpu.pipeline_mode<synchronous>, transform_indices = @transform_2, window_bounds = array<i64: 1, 32>}, {pipeline_mode = #tpu.pipeline_mode<synchronous>, transform_indices = @transform_3, window_bounds = array<i64: 32, 32>}, {pipeline_mode = #tpu.pipeline_mode<synchronous>, transform_indices = @transform_4, window_bounds = array<i64: 1, 32>}, {pipeline_mode = #tpu.pipeline_mode<synchronous>, transform_indices = @transform_5, window_bounds = array<i64: 32, 128>}, {pipeline_mode = #tpu.pipeline_mode<synchronous>, transform_indices = @transform_6, window_bounds = array<i64: 1, 128>}, {transform_indices = @transform_7, window_bounds = array<i64: 16, 128>}]} {
    %c0 = arith.constant 0 : index
    %c0_0 = arith.constant 0 : index
    %0 = vector.load %arg1[%c0, %c0_0] : memref<16x16xf32, #tpu.memory_space<vmem>>, vector<16x16xf32>
    %c0_1 = arith.constant 0 : index
    %c0_2 = arith.constant 0 : index
    %1 = vector.load %arg2[%c0_1, %c0_2] : memref<16x32xf32, #tpu.memory_space<vmem>>, vector<16x32xf32>
    %cst = arith.constant dense<0.000000e+00> : vector<16x32xf32>
    %2 = tpu.matmul %0, %1, %cst {dimension_numbers = #tpu.dot_dimension_numbers<[1], [0], [0], [1], [0, 0, 1, 1], [], []>} : vector<16x16xf32>, vector<16x32xf32>, vector<16x32xf32> -> vector<16x32xf32>
    %c0_3 = arith.constant 0 : index
    %c0_4 = arith.constant 0 : index
    %3 = vector.load %arg3[%c0_3, %c0_4] : memref<1x32xf32, #tpu.memory_space<vmem>>, vector<1x32xf32>
    %4 = vector.broadcast %3 : vector<1x32xf32> to vector<16x32xf32>
    %5 = arith.addf %2, %4 : vector<16x32xf32>
    %cst_5 = arith.constant 0.000000e+00 : f32
    %6 = vector.broadcast %cst_5 : f32 to vector<16x32xf32>
    %7 = arith.maximumf %5, %6 : vector<16x32xf32>
    %c0_6 = arith.constant 0 : index
    %c0_7 = arith.constant 0 : index
    %8 = vector.load %arg4[%c0_6, %c0_7] : memref<32x32xf32, #tpu.memory_space<vmem>>, vector<32x32xf32>
    %cst_8 = arith.constant dense<0.000000e+00> : vector<16x32xf32>
    %9 = tpu.matmul %7, %8, %cst_8 {dimension_numbers = #tpu.dot_dimension_numbers<[1], [0], [0], [1], [0, 0, 1, 1], [], []>} : vector<16x32xf32>, vector<32x32xf32>, vector<16x32xf32> -> vector<16x32xf32>
    %c0_9 = arith.constant 0 : index
    %c0_10 = arith.constant 0 : index
    %10 = vector.load %arg5[%c0_9, %c0_10] : memref<1x32xf32, #tpu.memory_space<vmem>>, vector<1x32xf32>
    %11 = vector.broadcast %10 : vector<1x32xf32> to vector<16x32xf32>
    %12 = arith.addf %9, %11 : vector<16x32xf32>
    %cst_11 = arith.constant 0.000000e+00 : f32
    %13 = vector.broadcast %cst_11 : f32 to vector<16x32xf32>
    %14 = arith.maximumf %12, %13 : vector<16x32xf32>
    %c0_12 = arith.constant 0 : index
    %c0_13 = arith.constant 0 : index
    %15 = vector.load %arg6[%c0_12, %c0_13] : memref<32x128xf32, #tpu.memory_space<vmem>>, vector<32x128xf32>
    %cst_14 = arith.constant dense<0.000000e+00> : vector<16x128xf32>
    %16 = tpu.matmul %14, %15, %cst_14 {dimension_numbers = #tpu.dot_dimension_numbers<[1], [0], [0], [1], [0, 0, 1, 1], [], []>} : vector<16x32xf32>, vector<32x128xf32>, vector<16x128xf32> -> vector<16x128xf32>
    %c0_15 = arith.constant 0 : index
    %c0_16 = arith.constant 0 : index
    %17 = vector.load %arg7[%c0_15, %c0_16] : memref<1x128xf32, #tpu.memory_space<vmem>>, vector<1x128xf32>
    %18 = vector.broadcast %17 : vector<1x128xf32> to vector<16x128xf32>
    %19 = arith.addf %16, %18 : vector<16x128xf32>
    %c0_17 = arith.constant 0 : index
    %c0_18 = arith.constant 0 : index
    %20 = vector.load %arg8[%c0_17, %c0_18] : memref<16x128xf32, #tpu.memory_space<vmem>>, vector<16x128xf32>
    tpu.vector_store %arg8[%c0_17, %c0_18], %19 {strides = array<i32>} : memref<16x128xf32, #tpu.memory_space<vmem>>, vector<16x128xf32>,
    return
  }
  func.func @transform_0(%arg0: i32) -> (i32, i32) {
    %c0_i32 = arith.constant 0 : i32
    %c0_i32_0 = arith.constant 0 : i32
    return %arg0, %c0_i32 : i32, i32
  }
  func.func @transform_1(%arg0: i32) -> (i32, i32) {
    %c0_i32 = arith.constant 0 : i32
    %c0_i32_0 = arith.constant 0 : i32
    %c0_i32_1 = arith.constant 0 : i32
    return %c0_i32, %c0_i32_0 : i32, i32
  }
  func.func @transform_2(%arg0: i32) -> (i32, i32) {
    %c0_i32 = arith.constant 0 : i32
    %c0_i32_0 = arith.constant 0 : i32
    %c0_i32_1 = arith.constant 0 : i32
    return %c0_i32, %c0_i32_0 : i32, i32
  }
  func.func @transform_3(%arg0: i32) -> (i32, i32) {
    %c0_i32 = arith.constant 0 : i32
    %c0_i32_0 = arith.constant 0 : i32
    %c0_i32_1 = arith.constant 0 : i32
    return %c0_i32, %c0_i32_0 : i32, i32
  }
  func.func @transform_4(%arg0: i32) -> (i32, i32) {
    %c0_i32 = arith.constant 0 : i32
    %c0_i32_0 = arith.constant 0 : i32
    %c0_i32_1 = arith.constant 0 : i32
    return %c0_i32, %c0_i32_0 : i32, i32
  }
  func.func @transform_5(%arg0: i32) -> (i32, i32) {
    %c0_i32 = arith.constant 0 : i32
    %c0_i32_0 = arith.constant 0 : i32
    %c0_i32_1 = arith.constant 0 : i32
    return %c0_i32, %c0_i32_0 : i32, i32
  }
  func.func @transform_6(%arg0: i32) -> (i32, i32) {
    %c0_i32 = arith.constant 0 : i32
    %c0_i32_0 = arith.constant 0 : i32
    %c0_i32_1 = arith.constant 0 : i32
    return %c0_i32, %c0_i32_0 : i32, i32
  }
  func.func @transform_7(%arg0: i32) -> (i32, i32) {
    %c0_i32 = arith.constant 0 : i32
    %c0_i32_0 = arith.constant 0 : i32
    return %arg0, %c0_i32 : i32, i32
  }
}

</mosaic_0001>

<llo_original>
// kernel: tpu_custom_call.1
$region0: #{tpu_custom_call.1}
  #allocation0 [shape = 'u32[]', space=smem, size = 0x4, offset = 0x4, fixed_abs, tag = 'smem constant byte address 0x4 - core index']
  #allocation1 [shape = 'u32[144,128]{1,0:T(1,128)}', space=vmem, size = 0x12000, scoped, tag = 'internal scratch']
  %s0 = inlined_call_operand.hbm [shape: f32[16,16], index: 0, kind: input, shape index: {}]
  %s1 = inlined_call_operand.hbm [shape: f32[16,32], index: 1, kind: input, shape index: {}]
  %s2 = inlined_call_operand.vmem [shape: f32[1,32], index: 2, kind: input, shape index: {}]
  %s3 = inlined_call_operand.hbm [shape: f32[32,32], index: 3, kind: input, shape index: {}]
  %s4 = inlined_call_operand.vmem [shape: f32[1,32], index: 4, kind: input, shape index: {}]
  %s5 = inlined_call_operand.hbm [shape: f32[32,128], index: 5, kind: input, shape index: {}]
  %s6 = inlined_call_operand.vmem [shape: f32[1,128], index: 6, kind: input, shape index: {}]
  %s7 = inlined_call_operand.hbm [shape: f32[16,128], index: 7, kind: output, shape index: {}]
  %s8 = sld [smem:[#allocation0]]
  $region54: #{tpu_custom_call.1} parent=0
    _
  %s10 = ssub.s32 1, %s8
  %s11 = scalar_select 0, %s10, %s8
  $region1: #{tpu_custom_call.1} parent=0
    #allocation2 [shape = 'u8[8192]{0}', space=vmem, size = 0x2000, scoped, tag = 'input window, operand 0, single buffered']
    #allocation3 [shape = 's32[1]{0}', space=sflag, size = 0x4, scoped, tag = 'scoped memory for tpu_custom_call.1']
    #allocation4 [shape = 's32[1]{0}', space=sflag, size = 0x4, scoped, tag = 'scoped memory for tpu_custom_call.1']
    #allocation5 [shape = 'u8[8192]{0}', space=vmem, size = 0x2000, scoped, tag = 'input window, operand 1, single buffered']
    #allocation6 [shape = 's32[1]{0}', space=sflag, size = 0x4, scoped, tag = 'scoped memory for tpu_custom_call.1']
    #allocation7 [shape = 'u8[16384]{0}', space=vmem, size = 0x4000, scoped, tag = 'input window, operand 3, single buffered']
    #allocation8 [shape = 'u8[16384]{0}', space=vmem, size = 0x4000, scoped, tag = 'input window, operand 5, single buffered']
    #allocation9 [shape = 's32[1]{0}', space=sflag, size = 0x4, scoped, tag = 'scoped memory for tpu_custom_call.1']
    #allocation10 [shape = 'u8[8192]{0}', space=vmem, size = 0x2000, scoped, tag = 'output window, operand 0, single buffered']
    %12 = vsyncpa [#allocation3], 0
    %13 = vsyncpa [#allocation6], 0
    %14 = vsyncpa [#allocation9], 0
    %15 = vsyncpa [#allocation4], 0
    // Predicated region
    $region2: #{tpu_custom_call.1} parent=1 // pred_check
      _
    $region3: #{tpu_custom_call.1} parent=1 // pred_check_branch
      %17 = sbr.rel (0) target = $region5
    $region4: #{tpu_custom_call.1} parent=1 // pred_region
      %s19 = ssub.s32 256, 256
      %20 = vsyncadd [#allocation3], %s19
      %s21 = sshll.u32 [#allocation2], 4
      %s22 = int_to_ptr.vmem [resolvable:$true] %s21
      %27 = dma.hbm_to_vmem [thread:$0]  %s0, 256, %s22, [#allocation3], 128, 128, 8
    $region5: #{tpu_custom_call.1} parent=1 // pred_fallthru
      _
    // Predicated region
    $region6: #{tpu_custom_call.1} parent=1 // pred_check
      _
    $region7: #{tpu_custom_call.1} parent=1 // pred_check_branch
      %29 = sbr.rel (0) target = $region9
    $region8: #{tpu_custom_call.1} parent=1 // pred_region
      %s31 = ssub.s32 256, 256
      %32 = vsyncadd [#allocation6], %s31
      %s33 = sshll.u32 [#allocation5], 4
      %s34 = int_to_ptr.vmem [resolvable:$true] %s33
      %39 = dma.hbm_to_vmem [thread:$0]  %s1, 256, %s34, [#allocation6], 128, 128, 8
    $region9: #{tpu_custom_call.1} parent=1 // pred_fallthru
      _
    // Predicated region
    $region10: #{tpu_custom_call.1} parent=1 // pred_check
      _
    $region11: #{tpu_custom_call.1} parent=1 // pred_check_branch
      %41 = sbr.rel (0) target = $region13
    $region12: #{tpu_custom_call.1} parent=1 // pred_region
      _
    $region13: #{tpu_custom_call.1} parent=1 // pred_fallthru
      _
    // Predicated region
    $region14: #{tpu_custom_call.1} parent=1 // pred_check
      _
    $region15: #{tpu_custom_call.1} parent=1 // pred_check_branch
      %43 = sbr.rel (0) target = $region17
    $region16: #{tpu_custom_call.1} parent=1 // pred_region
      %s45 = ssub.s32 512, 512
      %46 = vsyncadd [#allocation6], %s45
      %s47 = sshll.u32 [#allocation7], 4
      %s48 = int_to_ptr.vmem [resolvable:$true] %s47
      %53 = dma.hbm_to_vmem [thread:$0]  %s3, 512, %s48, [#allocation6], 128, 128, 8
    $region17: #{tpu_custom_call.1} parent=1 // pred_fallthru
      _
    // Predicated region
    $region18: #{tpu_custom_call.1} parent=1 // pred_check
      _
    $region19: #{tpu_custom_call.1} parent=1 // pred_check_branch
      %55 = sbr.rel (0) target = $region21
    $region20: #{tpu_custom_call.1} parent=1 // pred_region
      _
    $region21: #{tpu_custom_call.1} parent=1 // pred_fallthru
      _
    // Predicated region
    $region22: #{tpu_custom_call.1} parent=1 // pred_check
      _
    $region23: #{tpu_custom_call.1} parent=1 // pred_check_branch
      %57 = sbr.rel (0) target = $region25
    $region24: #{tpu_custom_call.1} parent=1 // pred_region
      %s59 = ssub.s32 512, 512
      %60 = vsyncadd [#allocation9], %s59
      %s61 = sshll.u32 [#allocation8], 4
      %s62 = int_to_ptr.vmem [resolvable:$true] %s61
      %67 = dma.hbm_to_vmem [thread:$0]  %s5, 512, %s62, [#allocation9], 128, 128, 8
    $region25: #{tpu_custom_call.1} parent=1 // pred_fallthru
      _
    // Predicated region
    $region26: #{tpu_custom_call.1} parent=1 // pred_check
      _
    $region27: #{tpu_custom_call.1} parent=1 // pred_check_branch
      %69 = sbr.rel (0) target = $region29
    $region28: #{tpu_custom_call.1} parent=1 // pred_region
      _
    $region29: #{tpu_custom_call.1} parent=1 // pred_fallthru
      _
    // Predicated region
    $region30: #{tpu_custom_call.1} parent=1 // pred_check
      _
    $region31: #{tpu_custom_call.1} parent=1 // pred_check_branch
      %71 = sbr.rel (0) target = $region33
    $region32: #{tpu_custom_call.1} parent=1 // pred_region
      %72 = dma.done [#allocation3], 256
    $region33: #{tpu_custom_call.1} parent=1 // pred_fallthru
      _
    // Predicated region
    $region34: #{tpu_custom_call.1} parent=1 // pred_check
      _
    $region35: #{tpu_custom_call.1} parent=1 // pred_check_branch
      %74 = sbr.rel (0) target = $region37
    $region36: #{tpu_custom_call.1} parent=1 // pred_region
      %75 = dma.done [#allocation6], 256
    $region37: #{tpu_custom_call.1} parent=1 // pred_fallthru
      _
    // Predicated region
    $region38: #{tpu_custom_call.1} parent=1 // pred_check
      _
    $region39: #{tpu_custom_call.1} parent=1 // pred_check_branch
      %77 = sbr.rel (0) target = $region41
    $region40: #{tpu_custom_call.1} parent=1 // pred_region
      %78 = dma.done [#allocation6], 512
    $region41: #{tpu_custom_call.1} parent=1 // pred_fallthru
      _
    // Predicated region
    $region42: #{tpu_custom_call.1} parent=1 // pred_check
      _
    $region43: #{tpu_custom_call.1} parent=1 // pred_check_branch
      %80 = sbr.rel (0) target = $region45
    $region44: #{tpu_custom_call.1} parent=1 // pred_region
      %81 = dma.done [#allocation9], 512
    $region45: #{tpu_custom_call.1} parent=1 // pred_fallthru
      _
    %v82 = vld [vmem:[#allocation2] sm:$0xff]
    %v83 = vld [vmem:[#allocation2 + $0x8] sm:$0xff]
    %v84 = vld [vmem:[#allocation5] sm:$0xff]
    %v85 = vld [vmem:[#allocation5 + $0x8] sm:$0xff]
    %v86 = vld [vmem:[%s2] sm:$0x1]
    %v88 = vlaneseq
    %v89 = vshrl.u32 %v88, 7
    %v90 = vsub.s32 0, %v89
    %v91 = vrot.slane %v86, %v90
    %vm93 = vcmask 130048
    %v95 = vsel %vm93, %v82, 0
    %v98 = vsel %vm93, %v83, 0
    %100 = vmatprep.subr.mxu0 0.0
    %101 = vmatpush1.msra.mxu0 %v84
    %102 = vmatprep.subr.mxu0 0.0
    %103 = vmatpush1.msra.mxu0 %v85
    %104 = vmatprep.subr.mxu0 0.0
    %105 = vmatpush1.msra.mxu0 0.0
    %106 = vmatprep.subr.mxu0 0.0
    %107 = vmatpush1.msra.mxu0 0.0
    %108 = vmatprep.subr.mxu0 0.0
    %109 = vmatpush1.msra.mxu0 0.0
    %110 = vmatprep.subr.mxu0 0.0
    %111 = vmatpush1.msra.mxu0 0.0
    %112 = vmatprep.subr.mxu0 0.0
    %113 = vmatpush1.msra.mxu0 0.0
    %114 = vmatprep.subr.mxu0 0.0
    %115 = vmatpush1.msra.mxu0 0.0
    %116 = vmatprep.subr.mxu0 0.0
    %117 = vmatpush1.msra.mxu0 0.0
    %118 = vmatprep.subr.mxu0 0.0
    %119 = vmatpush1.msra.mxu0 0.0
    %120 = vmatprep.subr.mxu0 0.0
    %121 = vmatpush1.msra.mxu0 0.0
    %122 = vmatprep.subr.mxu0 0.0
    %123 = vmatpush1.msra.mxu0 0.0
    %124 = vmatprep.subr.mxu0 0.0
    %125 = vmatpush1.msra.mxu0 0.0
    %126 = vmatprep.subr.mxu0 0.0
    %127 = vmatpush1.msra.mxu0 0.0
    %128 = vmatprep.subr.mxu0 0.0
    %129 = vmatpush1.msra.mxu0 0.0
    %130 = vmatprep.subr.mxu0 0.0
    %131 = vmatpush1.msra.mxu0 0.0
    %132 = vmatprep.subr.mxu0 0.0
    %133 = vmatpush1.msra.mxu0 0.0
    %134 = vmatprep.subr.mxu0 0.0
    %135 = vmatpush1.msra.mxu0 0.0
    %136 = vmatprep.subr.mxu0 0.0
    %137 = vmatpush1.msra.mxu0 0.0
    %138 = vmatprep.subr.mxu0 0.0
    %139 = vmatpush1.msra.mxu0 0.0
    %140 = vmatprep.subr.mxu0 0.0
    %141 = vmatpush1.msra.mxu0 0.0
    %142 = vmatprep.subr.mxu0 0.0
    %143 = vmatpush1.msra.mxu0 0.0
    %144 = vmatprep.subr.mxu0 0.0
    %145 = vmatpush1.msra.mxu0 0.0
    %146 = vmatprep.subr.mxu0 0.0
    %147 = vmatpush1.msra.mxu0 0.0
    %148 = vmatprep.subr.mxu0 0.0
    %149 = vmatpush1.msra.mxu0 0.0
    %150 = vmatprep.subr.mxu0 0.0
    %151 = vmatpush1.msra.mxu0 0.0
    %152 = vmatprep.subr.mxu0 0.0
    %153 = vmatpush1.msra.mxu0 0.0
    %154 = vmatprep.subr.mxu0 0.0
    %155 = vmatpush1.msra.mxu0 0.0
    %156 = vmatprep.subr.mxu0 0.0
    %157 = vmatpush1.msra.mxu0 0.0
    %158 = vmatprep.subr.mxu0 0.0
    %159 = vmatpush1.msra.mxu0 0.0
    %160 = vmatprep.subr.mxu0 0.0
    %161 = vmatpush1.msra.mxu0 0.0
    %162 = vmatprep.subr.mxu0 0.0
    %163 = vmatpush1.msra.mxu0 0.0
    %164 = vmatprep.mubr.f32.mxu0 0.0
    %165 = vmatmul.mubr.f32.gmra.mrb[0].mxu0 %v95
    %v166 = vpop.f32.mrb[0].mxu0
    %v167 = vadd.f32 %v91, %v166
    %v168 = vpop.f32.mrb[0].mxu0
    %169 = vmatprep.mubr.f32.mxu0 0.0
    %170 = vmatmul.mubr.f32.gmra.mrb[0].mxu0 %v98
    %v171 = vpop.f32.mrb[0].mxu0
    %v172 = vadd.f32 %v91, %v171
    %v173 = vpop.f32.mrb[0].mxu0
    %174 = vdwg.mxu0
    %v175 = vmax.f32 %v167, 0.0
    %v176 = vmax.f32 %v172, 0.0
    %v177 = vld [vmem:[#allocation7] sm:$0xff]
    %v178 = vld [vmem:[#allocation7 + $0x8] sm:$0xff]
    %v179 = vld [vmem:[#allocation7 + $0x10] sm:$0xff]
    %v180 = vld [vmem:[#allocation7 + $0x18] sm:$0xff]
    %v181 = vld [vmem:[%s4] sm:$0x1]
    %v183 = vlaneseq
    %v184 = vshrl.u32 %v183, 7
    %v185 = vsub.s32 0, %v184
    %v186 = vrot.slane %v181, %v185
    %vm188 = vcmask 261120
    %v190 = vsel %vm188, %v175, 0
    %v193 = vsel %vm188, %v176, 0
    %195 = vmatprep.subr.mxu0 0.0
    %196 = vmatpush1.msra.mxu0 %v177
    %197 = vmatprep.subr.mxu0 0.0
    %198 = vmatpush1.msra.mxu0 %v178
    %199 = vmatprep.subr.mxu0 0.0
    %200 = vmatpush1.msra.mxu0 %v179
    %201 = vmatprep.subr.mxu0 0.0
    %202 = vmatpush1.msra.mxu0 %v180
    %203 = vmatprep.subr.mxu0 0.0
    %204 = vmatpush1.msra.mxu0 0.0
    %205 = vmatprep.subr.mxu0 0.0
    %206 = vmatpush1.msra.mxu0 0.0
    %207 = vmatprep.subr.mxu0 0.0
    %208 = vmatpush1.msra.mxu0 0.0
    %209 = vmatprep.subr.mxu0 0.0
    %210 = vmatpush1.msra.mxu0 0.0
    %211 = vmatprep.subr.mxu0 0.0
    %212 = vmatpush1.msra.mxu0 0.0
    %213 = vmatprep.subr.mxu0 0.0
    %214 = vmatpush1.msra.mxu0 0.0
    %215 = vmatprep.subr.mxu0 0.0
    %216 = vmatpush1.msra.mxu0 0.0
    %217 = vmatprep.subr.mxu0 0.0
    %218 = vmatpush1.msra.mxu0 0.0
    %219 = vmatprep.subr.mxu0 0.0
    %220 = vmatpush1.msra.mxu0 0.0
    %221 = vmatprep.subr.mxu0 0.0
    %222 = vmatpush1.msra.mxu0 0.0
    %223 = vmatprep.subr.mxu0 0.0
    %224 = vmatpush1.msra.mxu0 0.0
    %225 = vmatprep.subr.mxu0 0.0
    %226 = vmatpush1.msra.mxu0 0.0
    %227 = vmatprep.subr.mxu0 0.0
    %228 = vmatpush1.msra.mxu0 0.0
    %229 = vmatprep.subr.mxu0 0.0
    %230 = vmatpush1.msra.mxu0 0.0
    %231 = vmatprep.subr.mxu0 0.0
    %232 = vmatpush1.msra.mxu0 0.0
    %233 = vmatprep.subr.mxu0 0.0
    %234 = vmatpush1.msra.mxu0 0.0
    %235 = vmatprep.subr.mxu0 0.0
    %236 = vmatpush1.msra.mxu0 0.0
    %237 = vmatprep.subr.mxu0 0.0
    %238 = vmatpush1.msra.mxu0 0.0
    %239 = vmatprep.subr.mxu0 0.0
    %240 = vmatpush1.msra.mxu0 0.0
    %241 = vmatprep.subr.mxu0 0.0
    %242 = vmatpush1.msra.mxu0 0.0
    %243 = vmatprep.subr.mxu0 0.0
    %244 = vmatpush1.msra.mxu0 0.0
    %245 = vmatprep.subr.mxu0 0.0
    %246 = vmatpush1.msra.mxu0 0.0
    %247 = vmatprep.subr.mxu0 0.0
    %248 = vmatpush1.msra.mxu0 0.0
    %249 = vmatprep.subr.mxu0 0.0
    %250 = vmatpush1.msra.mxu0 0.0
    %251 = vmatprep.subr.mxu0 0.0
    %252 = vmatpush1.msra.mxu0 0.0
    %253 = vmatprep.subr.mxu0 0.0
    %254 = vmatpush1.msra.mxu0 0.0
    %255 = vmatprep.subr.mxu0 0.0
    %256 = vmatpush1.msra.mxu0 0.0
    %257 = vmatprep.subr.mxu0 0.0
    %258 = vmatpush1.msra.mxu0 0.0
    %259 = vmatprep.mubr.f32.mxu0 0.0
    %260 = vmatmul.mubr.f32.gmra.mrb[0].mxu0 %v190
    %v261 = vpop.f32.mrb[0].mxu0
    %v262 = vadd.f32 %v186, %v261
    %v263 = vpop.f32.mrb[0].mxu0
    %264 = vmatprep.mubr.f32.mxu0 0.0
    %265 = vmatmul.mubr.f32.gmra.mrb[0].mxu0 %v193
    %v266 = vpop.f32.mrb[0].mxu0
    %v267 = vadd.f32 %v186, %v266
    %v268 = vpop.f32.mrb[0].mxu0
    %269 = vdwg.mxu0
    %v270 = vmax.f32 %v262, 0.0
    %v271 = vmax.f32 %v267, 0.0
    %v272 = vld [vmem:[#allocation8] sm:$0xff]
    %v273 = vld [vmem:[#allocation8 + $0x8] sm:$0xff]
    %v274 = vld [vmem:[#allocation8 + $0x10] sm:$0xff]
    %v275 = vld [vmem:[#allocation8 + $0x18] sm:$0xff]
    %v276 = vld [vmem:[%s6] sm:$0x1]
    %v278 = vlaneseq
    %v279 = vshrl.u32 %v278, 7
    %v280 = vsub.s32 0, %v279
    %v281 = vrot.slane %v276, %v280
    %v284 = vsel %vm188, %v270, 0
    %v287 = vsel %vm188, %v271, 0
    %289 = vmatprep.subr.mxu0 0.0
    %290 = vmatpush1.msra.mxu0 %v272
    %291 = vmatprep.subr.mxu0 0.0
    %292 = vmatpush1.msra.mxu0 %v273
    %293 = vmatprep.subr.mxu0 0.0
    %294 = vmatpush1.msra.mxu0 %v274
    %295 = vmatprep.subr.mxu0 0.0
    %296 = vmatpush1.msra.mxu0 %v275
    %297 = vmatprep.subr.mxu0 0.0
    %298 = vmatpush1.msra.mxu0 0.0
    %299 = vmatprep.subr.mxu0 0.0
    %300 = vmatpush1.msra.mxu0 0.0
    %301 = vmatprep.subr.mxu0 0.0
    %302 = vmatpush1.msra.mxu0 0.0
    %303 = vmatprep.subr.mxu0 0.0
    %304 = vmatpush1.msra.mxu0 0.0
    %305 = vmatprep.subr.mxu0 0.0
    %306 = vmatpush1.msra.mxu0 0.0
    %307 = vmatprep.subr.mxu0 0.0
    %308 = vmatpush1.msra.mxu0 0.0
    %309 = vmatprep.subr.mxu0 0.0
    %310 = vmatpush1.msra.mxu0 0.0
    %311 = vmatprep.subr.mxu0 0.0
    %312 = vmatpush1.msra.mxu0 0.0
    %313 = vmatprep.subr.mxu0 0.0
    %314 = vmatpush1.msra.mxu0 0.0
    %315 = vmatprep.subr.mxu0 0.0
    %316 = vmatpush1.msra.mxu0 0.0
    %317 = vmatprep.subr.mxu0 0.0
    %318 = vmatpush1.msra.mxu0 0.0
    %319 = vmatprep.subr.mxu0 0.0
    %320 = vmatpush1.msra.mxu0 0.0
    %321 = vmatprep.subr.mxu0 0.0
    %322 = vmatpush1.msra.mxu0 0.0
    %323 = vmatprep.subr.mxu0 0.0
    %324 = vmatpush1.msra.mxu0 0.0
    %325 = vmatprep.subr.mxu0 0.0
    %326 = vmatpush1.msra.mxu0 0.0
    %327 = vmatprep.subr.mxu0 0.0
    %328 = vmatpush1.msra.mxu0 0.0
    %329 = vmatprep.subr.mxu0 0.0
    %330 = vmatpush1.msra.mxu0 0.0
    %331 = vmatprep.subr.mxu0 0.0
    %332 = vmatpush1.msra.mxu0 0.0
    %333 = vmatprep.subr.mxu0 0.0
    %334 = vmatpush1.msra.mxu0 0.0
    %335 = vmatprep.subr.mxu0 0.0
    %336 = vmatpush1.msra.mxu0 0.0
    %337 = vmatprep.subr.mxu0 0.0
    %338 = vmatpush1.msra.mxu0 0.0
    %339 = vmatprep.subr.mxu0 0.0
    %340 = vmatpush1.msra.mxu0 0.0
    %341 = vmatprep.subr.mxu0 0.0
    %342 = vmatpush1.msra.mxu0 0.0
    %343 = vmatprep.subr.mxu0 0.0
    %344 = vmatpush1.msra.mxu0 0.0
    %345 = vmatprep.subr.mxu0 0.0
    %346 = vmatpush1.msra.mxu0 0.0
    %347 = vmatprep.subr.mxu0 0.0
    %348 = vmatpush1.msra.mxu0 0.0
    %349 = vmatprep.subr.mxu0 0.0
    %350 = vmatpush1.msra.mxu0 0.0
    %351 = vmatprep.subr.mxu0 0.0
    %352 = vmatpush1.msra.mxu0 0.0
    %353 = vmatprep.mubr.f32.mxu0 0.0
    %354 = vmatmul.mubr.f32.gmra.mrb[0].mxu0 %v284
    %v355 = vpop.f32.mrb[0].mxu0
    %v356 = vadd.f32 %v281, %v355
    %v357 = vpop.f32.mrb[0].mxu0
    %358 = vmatprep.mubr.f32.mxu0 0.0
    %359 = vmatmul.mubr.f32.gmra.mrb[0].mxu0 %v287
    %v360 = vpop.f32.mrb[0].mxu0
    %v361 = vadd.f32 %v281, %v360
    %v362 = vpop.f32.mrb[0].mxu0
    %363 = vdwg.mxu0
    %364 = vst [vmem:[#allocation10] sm:$0xff] %v356
    %365 = vst [vmem:[#allocation10 + $0x8] sm:$0xff] %v361
    // Predicated region
    $region46: #{tpu_custom_call.1} parent=1 // pred_check
      _
    $region47: #{tpu_custom_call.1} parent=1 // pred_check_branch
      %367 = sbr.rel (0) target = $region49
    $region48: #{tpu_custom_call.1} parent=1 // pred_region
      %s369 = ssub.s32 256, 256
      %370 = vsyncadd [#allocation4], %s369
      %s371 = sshll.u32 [#allocation10], 4
      %s372 = int_to_ptr.vmem [resolvable:$true] %s371
      %377 = dma.vmem_to_hbm [thread:$0]  %s372, 256, %s7, [#allocation4], 128, 128, 8
    $region49: #{tpu_custom_call.1} parent=1 // pred_fallthru
      _
    // Predicated region
    $region50: #{tpu_custom_call.1} parent=1 // pred_check
      _
    $region51: #{tpu_custom_call.1} parent=1 // pred_check_branch
      %379 = sbr.rel (0) target = $region53
    $region52: #{tpu_custom_call.1} parent=1 // pred_region
      %380 = dma.done [#allocation4], 256
    $region53: #{tpu_custom_call.1} parent=1 // pred_fallthru
      _
    %381 = vsyncpa [#allocation3], 1
    %382 = vsyncpa [#allocation6], 1
    %383 = vsyncpa [#allocation9], 1
    %384 = vsyncpa [#allocation4], 1

</llo_original>
